<compile_context>
chip_gen: v5e
topology: v5e:2x2
jax: 0.10.0
libtpu: 0.0.40
codegen_flags: <defaults>
</compile_context>

<pallas_src>
import jax
import jax.numpy as jnp
from jax import lax
from jax.experimental import pallas as pl
from jax.experimental.pallas import tpu as pltpu

LANE = 128
SUBLANE = 8


def _round_up(x, m):
    return ((x + m - 1) // m) * m


def lstm_kernel(x_ref, wih_ref, whh_ref, b_ref, wlin_ref, blin_ref,
                out_ref, xproj_sc):
    S, B, E = x_ref.shape            # x is bf16, (seq, padded batch, padded embed)
    Hg = whh_ref.shape[0]            # per-gate hidden width; 4*Hg is a lane-tile multiple

    # --- Hoisted input projection for every timestep: one bf16 MXU matmul,
    # bias folded in once (no per-step broadcasts).  f32 accumulation in VMEM scratch.
    x_all = x_ref[...].reshape(S * B, E)
    xproj_sc[...] = (
        jnp.dot(x_all, wih_ref[...], preferred_element_type=jnp.float32)
        + b_ref[...]
    )

    # --- Time recurrence: only the small h @ W_hh matmul + gate math per step.
    def step(t, carry):
        h_prev, c_prev = carry
        row = pl.multiple_of(t * B, SUBLANE)          # B is a sublane multiple
        gates = xproj_sc[pl.ds(row, B), :] + jnp.dot(
            h_prev.astype(jnp.bfloat16), whh_ref[...],
            preferred_element_type=jnp.float32)
        # Packed gate order [i, f, g, o], each Hg lanes wide; gate math stays f32.
        i_g = jax.nn.sigmoid(gates[:, 0 * Hg:1 * Hg])
        f_g = jax.nn.sigmoid(gates[:, 1 * Hg:2 * Hg])
        g_g = jnp.tanh(gates[:, 2 * Hg:3 * Hg])
        o_g = jax.nn.sigmoid(gates[:, 3 * Hg:4 * Hg])
        c_new = f_g * c_prev + i_g * g_g
        h_new = o_g * jnp.tanh(c_new)
        return h_new, c_new

    h0 = jnp.zeros((B, Hg), jnp.float32)
    c0 = jnp.zeros((B, Hg), jnp.float32)
    h_last, _ = lax.fori_loop(0, S, step, (h0, c0),
                              unroll=True if S <= 16 else 8)

    # --- Linear head + sigmoid; lane-dense (B, Lp) store.
    logits = jnp.dot(h_last.astype(jnp.bfloat16), wlin_ref[...],
                     preferred_element_type=jnp.float32) + blin_ref[...]
    out_ref[...] = jax.nn.sigmoid(logits)


def pack_params(raw):
    """Pad + transpose PyTorch-layout parameters into TPU-friendly bf16 layouts."""
    V, E = raw["embed"].shape
    H = raw["w_hh"].shape[1]
    L = raw["w_lin"].shape[0]
    Ep = _round_up(E, LANE)
    Hg = _round_up(H, 32)            # 4*Hg is a multiple of 128 -> packed gates fill lane tiles
    Lp = _round_up(L, LANE)

    embed = jnp.pad(raw["embed"], ((0, 0), (0, Ep - E))).astype(jnp.bfloat16)  # (V, Ep)

    # weight_ih_l0: (4H, E) -> (Ep, 4*Hg); gate k lives in columns [k*Hg, k*Hg + H).
    w_ih = raw["w_ih"].reshape(4, H, E)
    w_ih = jnp.pad(w_ih, ((0, 0), (0, Hg - H), (0, Ep - E)))
    wih_t = jnp.transpose(w_ih, (2, 0, 1)).reshape(Ep, 4 * Hg).astype(jnp.bfloat16)

    # weight_hh_l0: (4H, H) -> (Hg, 4*Hg), zero-padded rows keep padded h lanes inert.
    w_hh = raw["w_hh"].reshape(4, H, H)
    w_hh = jnp.pad(w_hh, ((0, 0), (0, Hg - H), (0, Hg - H)))
    whh_t = jnp.transpose(w_hh, (2, 0, 1)).reshape(Hg, 4 * Hg).astype(jnp.bfloat16)

    # b_ih + b_hh, per-gate padded: (1, 4*Hg), kept f32 (added to f32 accumulation).
    b = (raw["b_ih"] + raw["b_hh"]).reshape(4, H)
    b = jnp.pad(b, ((0, 0), (0, Hg - H))).reshape(1, 4 * Hg)

    # lin: weight (L, H) -> (Hg, Lp) bf16, bias (L,) -> (1, Lp) f32.
    w_lin = jnp.pad(raw["w_lin"], ((0, Lp - L), (0, Hg - H)))
    wlin_t = jnp.transpose(w_lin).astype(jnp.bfloat16)
    blin = jnp.pad(raw["b_lin"], (0, Lp - L)).reshape(1, Lp)

    return {"embed": embed, "wih_t": wih_t, "whh_t": whh_t, "b": b,
            "wlin_t": wlin_t, "blin": blin}


def lstm_model_forward(x_ids, packed, num_labels):
    """x_ids: (batch, seq) int32.  Returns (batch, num_labels) float32."""
    B, S = x_ids.shape
    Ep = packed["embed"].shape[1]
    Hg, G = packed["whh_t"].shape
    Lp = packed["wlin_t"].shape[1]
    Bp = _round_up(B, SUBLANE)

    # Pad batch to a sublane multiple; gather directly in (seq, batch) order so no
    # (S, B, E) HBM transpose of activations is ever materialized; bf16 halves DMA bytes.
    ids = jnp.pad(x_ids, ((0, Bp - B), (0, 0)))
    x_emb = jnp.take(packed["embed"], ids.T, axis=0)          # (S, Bp, Ep) bf16

    out = pl.pallas_call(
        lstm_kernel,
        out_shape=jax.ShapeDtypeStruct((Bp, Lp), jnp.float32),
        grid_spec=pltpu.PrefetchScalarGridSpec(
            num_scalar_prefetch=0,
            grid=(1,),
            in_specs=[
                pl.BlockSpec((S, Bp, Ep), lambda i: (0, 0, 0)),
                pl.BlockSpec((Ep, G), lambda i: (0, 0)),
                pl.BlockSpec((Hg, G), lambda i: (0, 0)),
                pl.BlockSpec((1, G), lambda i: (0, 0)),
                pl.BlockSpec((Hg, Lp), lambda i: (0, 0)),
                pl.BlockSpec((1, Lp), lambda i: (0, 0)),
            ],
            out_specs=pl.BlockSpec((Bp, Lp), lambda i: (0, 0)),
            scratch_shapes=[
                pltpu.VMEM((S * Bp, G), jnp.float32),   # hoisted x @ W_ih + b (f32)
            ],
        ),
        compiler_params=pltpu.CompilerParams(
            dimension_semantics=("arbitrary",),
        ),
    )(x_emb, packed["wih_t"], packed["whh_t"], packed["b"],
      packed["wlin_t"], packed["blin"])

    return out[:B, :num_labels]


def init_params(key, vocab_size, embed_dim, hidden_dim, num_labels):
    """Raw parameters in PyTorch layout (for both kernel packing and reference)."""
    ks = jax.random.split(key, 7)
    scale = 0.1
    return {
        "embed": scale * jax.random.normal(ks[0], (vocab_size, embed_dim), jnp.float32),
        "w_ih": scale * jax.random.normal(ks[1], (4 * hidden_dim, embed_dim), jnp.float32),
        "w_hh": scale * jax.random.normal(ks[2], (4 * hidden_dim, hidden_dim), jnp.float32),
        "b_ih": scale * jax.random.normal(ks[3], (4 * hidden_dim,), jnp.float32),
        "b_hh": scale * jax.random.normal(ks[4], (4 * hidden_dim,), jnp.float32),
        "w_lin": scale * jax.random.normal(ks[5], (num_labels, hidden_dim), jnp.float32),
        "b_lin": scale * jax.random.normal(ks[6], (num_labels,), jnp.float32),
    }


def lstm_reference(x_ids, raw):
    """Pure-JAX f32 reference matching PyTorch LSTMModel.forward with zero init_hidden."""
    x = jnp.take(raw["embed"], x_ids, axis=0)      # (B, S, E)
    x = jnp.transpose(x, (1, 0, 2))                # (S, B, E)
    B = x.shape[1]
    H = raw["w_hh"].shape[1]
    bias = raw["b_ih"] + raw["b_hh"]

    def step(carry, x_t):
        h, c = carry
        gates = x_t @ raw["w_ih"].T + h @ raw["w_hh"].T + bias
        i, f, g, o = jnp.split(gates, 4, axis=1)
        i = jax.nn.sigmoid(i)
        f = jax.nn.sigmoid(f)
        g = jnp.tanh(g)
        o = jax.nn.sigmoid(o)
        c = f * c + i * g
        h = o * jnp.tanh(c)
        return (h, c), None

    (h, _), _ = lax.scan(step, (jnp.zeros((B, H)), jnp.zeros((B, H))), x)
    return jax.nn.sigmoid(h @ raw["w_lin"].T + raw["b_lin"])


if __name__ == "__main__":
    batch_size = 2
    seq_len = 8
    vocab_size = 50
    embed_dim = 32
    hidden_dim = 32
    num_labels = 4

    key = jax.random.PRNGKey(0)
    k_param, k_ids = jax.random.split(key)
    raw = init_params(k_param, vocab_size, embed_dim, hidden_dim, num_labels)
    packed = pack_params(raw)

    x_ids = jax.random.randint(k_ids, (batch_size, seq_len), 0, vocab_size,
                               dtype=jnp.int32)

    out = lstm_model_forward(x_ids, packed, num_labels)
    jax.block_until_ready(out)

    assert out.shape == (batch_size, num_labels)
    assert out.dtype == jnp.float32

    ref = lstm_reference(x_ids, raw)
    assert jnp.allclose(out, ref, atol=1e-2, rtol=1e-2)

    print("KERNEL_OK")
</pallas_src>

<mosaic_0001>
module attributes {stable_mosaic.version = 11 : i64} {
  func.func @lstm_kernel(%arg0: i32, %arg1: memref<8x8x128xbf16, #tpu.memory_space<vmem>>, %arg2: memref<128x128xbf16, #tpu.memory_space<vmem>>, %arg3: memref<32x128xbf16, #tpu.memory_space<vmem>>, %arg4: memref<1x128xf32, #tpu.memory_space<vmem>>, %arg5: memref<32x128xbf16, #tpu.memory_space<vmem>>, %arg6: memref<1x128xf32, #tpu.memory_space<vmem>>, %arg7: memref<8x128xf32, #tpu.memory_space<vmem>>, %arg8: memref<64x128xf32, #tpu.memory_space<vmem>>) attributes {dimension_semantics = [#tpu.dimension_semantics<arbitrary>], iteration_bounds = array<i64: 1>, scalar_prefetch = 0 : i64, scratch_operands = 1 : i64, tpu.core_type = #tpu.core_type<tc>, window_params = [{pipeline_mode = #tpu.pipeline_mode<synchronous>, transform_indices = @transform_0, window_bounds = array<i64: 8, 8, 128>}, {pipeline_mode = #tpu.pipeline_mode<synchronous>, transform_indices = @transform_1, window_bounds = array<i64: 128, 128>}, {pipeline_mode = #tpu.pipeline_mode<synchronous>, transform_indices = @transform_2, window_bounds = array<i64: 32, 128>}, {pipeline_mode = #tpu.pipeline_mode<synchronous>, transform_indices = @transform_3, window_bounds = array<i64: 1, 128>}, {pipeline_mode = #tpu.pipeline_mode<synchronous>, transform_indices = @transform_4, window_bounds = array<i64: 32, 128>}, {pipeline_mode = #tpu.pipeline_mode<synchronous>, transform_indices = @transform_5, window_bounds = array<i64: 1, 128>}, {pipeline_mode = #tpu.pipeline_mode<synchronous>, transform_indices = @transform_6, window_bounds = array<i64: 8, 128>}]} {
    %c0 = arith.constant 0 : index
    %c0_0 = arith.constant 0 : index
    %c0_1 = arith.constant 0 : index
    %0 = vector.load %arg1[%c0, %c0_0, %c0_1] : memref<8x8x128xbf16, #tpu.memory_space<vmem>>, vector<8x8x128xbf16>
    %1 = vector.shape_cast %0 : vector<8x8x128xbf16> to vector<64x128xbf16>
    %c0_2 = arith.constant 0 : index
    %c0_3 = arith.constant 0 : index
    %2 = vector.load %arg2[%c0_2, %c0_3] : memref<128x128xbf16, #tpu.memory_space<vmem>>, vector<128x128xbf16>
    %cst = arith.constant dense<0.000000e+00> : vector<64x128xf32>
    %3 = tpu.matmul %1, %2, %cst {dimension_numbers = #tpu.dot_dimension_numbers<[1], [0], [0], [1], [0, 0, 1, 1], [], []>} : vector<64x128xbf16>, vector<128x128xbf16>, vector<64x128xf32> -> vector<64x128xf32>
    %c0_4 = arith.constant 0 : index
    %c0_5 = arith.constant 0 : index
    %4 = vector.load %arg4[%c0_4, %c0_5] : memref<1x128xf32, #tpu.memory_space<vmem>>, vector<1x128xf32>
    %5 = vector.broadcast %4 : vector<1x128xf32> to vector<64x128xf32>
    %6 = arith.addf %3, %5 : vector<64x128xf32>
    %c0_6 = arith.constant 0 : index
    %c0_7 = arith.constant 0 : index
    %7 = vector.load %arg8[%c0_6, %c0_7] : memref<64x128xf32, #tpu.memory_space<vmem>>, vector<64x128xf32>
    tpu.vector_store %arg8[%c0_6, %c0_7], %6 {strides = array<i32>} : memref<64x128xf32, #tpu.memory_space<vmem>>, vector<64x128xf32>,
    %cst_8 = arith.constant 0.000000e+00 : f32
    %8 = vector.broadcast %cst_8 : f32 to vector<8x32xf32>
    %cst_9 = arith.constant 0.000000e+00 : f32
    %9 = vector.broadcast %cst_9 : f32 to vector<8x32xf32>
    %c0_i32 = arith.constant 0 : i32
    %c8_i32 = arith.constant 8 : i32
    %10 = arith.muli %c0_i32, %c8_i32 : i32
    %11 = tpu.assume_multiple %10, 8 : i32
    %12 = arith.index_cast %11 : i32 to index
    %c0_10 = arith.constant 0 : index
    %13 = vector.load %arg8[%12, %c0_10] : memref<64x128xf32, #tpu.memory_space<vmem>>, vector<8x128xf32>
    %14 = arith.truncf %8 : vector<8x32xf32> to vector<8x32xbf16>
    %c0_11 = arith.constant 0 : index
    %c0_12 = arith.constant 0 : index
    %15 = vector.load %arg3[%c0_11, %c0_12] : memref<32x128xbf16, #tpu.memory_space<vmem>>, vector<32x128xbf16>
    %cst_13 = arith.constant dense<0.000000e+00> : vector<8x128xf32>
    %16 = tpu.matmul %14, %15, %cst_13 {dimension_numbers = #tpu.dot_dimension_numbers<[1], [0], [0], [1], [0, 0, 1, 1], [], []>} : vector<8x32xbf16>, vector<32x128xbf16>, vector<8x128xf32> -> vector<8x128xf32>
    %17 = arith.addf %13, %16 : vector<8x128xf32>
    %18 = vector.extract_strided_slice %17 {offsets = [0, 0], sizes = [8, 32], strides = [1, 1]} : vector<8x128xf32> to vector<8x32xf32>
    %19 = arith.negf %18 : vector<8x32xf32>
    %20 = math.exp %19 : vector<8x32xf32>
    %cst_14 = arith.constant 1.000000e+00 : f32
    %21 = vector.broadcast %cst_14 : f32 to vector<8x32xf32>
    %22 = arith.addf %21, %20 : vector<8x32xf32>
    %23 = arith.divf %21, %22 : vector<8x32xf32>
    %24 = vector.extract_strided_slice %17 {offsets = [0, 32], sizes = [8, 32], strides = [1, 1]} : vector<8x128xf32> to vector<8x32xf32>
    %25 = arith.negf %24 : vector<8x32xf32>
    %26 = math.exp %25 : vector<8x32xf32>
    %cst_15 = arith.constant 1.000000e+00 : f32
    %27 = vector.broadcast %cst_15 : f32 to vector<8x32xf32>
    %28 = arith.addf %27, %26 : vector<8x32xf32>
    %29 = arith.divf %27, %28 : vector<8x32xf32>
    %30 = vector.extract_strided_slice %17 {offsets = [0, 64], sizes = [8, 32], strides = [1, 1]} : vector<8x128xf32> to vector<8x32xf32>
    %31 = math.tanh %30 : vector<8x32xf32>
    %32 = vector.extract_strided_slice %17 {offsets = [0, 96], sizes = [8, 32], strides = [1, 1]} : vector<8x128xf32> to vector<8x32xf32>
    %33 = arith.negf %32 : vector<8x32xf32>
    %34 = math.exp %33 : vector<8x32xf32>
    %cst_16 = arith.constant 1.000000e+00 : f32
    %35 = vector.broadcast %cst_16 : f32 to vector<8x32xf32>
    %36 = arith.addf %35, %34 : vector<8x32xf32>
    %37 = arith.divf %35, %36 : vector<8x32xf32>
    %38 = arith.mulf %29, %9 : vector<8x32xf32>
    %39 = arith.mulf %23, %31 : vector<8x32xf32>
    %40 = arith.addf %38, %39 : vector<8x32xf32>
    %41 = math.tanh %40 : vector<8x32xf32>
    %42 = arith.mulf %37, %41 : vector<8x32xf32>
    %c1_i32 = arith.constant 1 : i32
    %c8_i32_17 = arith.constant 8 : i32
    %43 = arith.muli %c1_i32, %c8_i32_17 : i32
    %44 = tpu.assume_multiple %43, 8 : i32
    %45 = arith.index_cast %44 : i32 to index
    %c0_18 = arith.constant 0 : index
    %46 = vector.load %arg8[%45, %c0_18] : memref<64x128xf32, #tpu.memory_space<vmem>>, vector<8x128xf32>
    %47 = arith.truncf %42 : vector<8x32xf32> to vector<8x32xbf16>
    %c0_19 = arith.constant 0 : index
    %c0_20 = arith.constant 0 : index
    %48 = vector.load %arg3[%c0_19, %c0_20] : memref<32x128xbf16, #tpu.memory_space<vmem>>, vector<32x128xbf16>
    %cst_21 = arith.constant dense<0.000000e+00> : vector<8x128xf32>
    %49 = tpu.matmul %47, %48, %cst_21 {dimension_numbers = #tpu.dot_dimension_numbers<[1], [0], [0], [1], [0, 0, 1, 1], [], []>} : vector<8x32xbf16>, vector<32x128xbf16>, vector<8x128xf32> -> vector<8x128xf32>
    %50 = arith.addf %46, %49 : vector<8x128xf32>
    %51 = vector.extract_strided_slice %50 {offsets = [0, 0], sizes = [8, 32], strides = [1, 1]} : vector<8x128xf32> to vector<8x32xf32>
    %52 = arith.negf %51 : vector<8x32xf32>
    %53 = math.exp %52 : vector<8x32xf32>
    %cst_22 = arith.constant 1.000000e+00 : f32
    %54 = vector.broadcast %cst_22 : f32 to vector<8x32xf32>
    %55 = arith.addf %54, %53 : vector<8x32xf32>
    %56 = arith.divf %54, %55 : vector<8x32xf32>
    %57 = vector.extract_strided_slice %50 {offsets = [0, 32], sizes = [8, 32], strides = [1, 1]} : vector<8x128xf32> to vector<8x32xf32>
    %58 = arith.negf %57 : vector<8x32xf32>
    %59 = math.exp %58 : vector<8x32xf32>
    %cst_23 = arith.constant 1.000000e+00 : f32
    %60 = vector.broadcast %cst_23 : f32 to vector<8x32xf32>
    %61 = arith.addf %60, %59 : vector<8x32xf32>
    %62 = arith.divf %60, %61 : vector<8x32xf32>
    %63 = vector.extract_strided_slice %50 {offsets = [0, 64], sizes = [8, 32], strides = [1, 1]} : vector<8x128xf32> to vector<8x32xf32>
    %64 = math.tanh %63 : vector<8x32xf32>
    %65 = vector.extract_strided_slice %50 {offsets = [0, 96], sizes = [8, 32], strides = [1, 1]} : vector<8x128xf32> to vector<8x32xf32>
    %66 = arith.negf %65 : vector<8x32xf32>
    %67 = math.exp %66 : vector<8x32xf32>
    %cst_24 = arith.constant 1.000000e+00 : f32
    %68 = vector.broadcast %cst_24 : f32 to vector<8x32xf32>
    %69 = arith.addf %68, %67 : vector<8x32xf32>
    %70 = arith.divf %68, %69 : vector<8x32xf32>
    %71 = arith.mulf %62, %40 : vector<8x32xf32>
    %72 = arith.mulf %56, %64 : vector<8x32xf32>
    %73 = arith.addf %71, %72 : vector<8x32xf32>
    %74 = math.tanh %73 : vector<8x32xf32>
    %75 = arith.mulf %70, %74 : vector<8x32xf32>
    %c2_i32 = arith.constant 2 : i32
    %c8_i32_25 = arith.constant 8 : i32
    %76 = arith.muli %c2_i32, %c8_i32_25 : i32
    %77 = tpu.assume_multiple %76, 8 : i32
    %78 = arith.index_cast %77 : i32 to index
    %c0_26 = arith.constant 0 : index
    %79 = vector.load %arg8[%78, %c0_26] : memref<64x128xf32, #tpu.memory_space<vmem>>, vector<8x128xf32>
    %80 = arith.truncf %75 : vector<8x32xf32> to vector<8x32xbf16>
    %c0_27 = arith.constant 0 : index
    %c0_28 = arith.constant 0 : index
    %81 = vector.load %arg3[%c0_27, %c0_28] : memref<32x128xbf16, #tpu.memory_space<vmem>>, vector<32x128xbf16>
    %cst_29 = arith.constant dense<0.000000e+00> : vector<8x128xf32>
    %82 = tpu.matmul %80, %81, %cst_29 {dimension_numbers = #tpu.dot_dimension_numbers<[1], [0], [0], [1], [0, 0, 1, 1], [], []>} : vector<8x32xbf16>, vector<32x128xbf16>, vector<8x128xf32> -> vector<8x128xf32>
    %83 = arith.addf %79, %82 : vector<8x128xf32>
    %84 = vector.extract_strided_slice %83 {offsets = [0, 0], sizes = [8, 32], strides = [1, 1]} : vector<8x128xf32> to vector<8x32xf32>
    %85 = arith.negf %84 : vector<8x32xf32>
    %86 = math.exp %85 : vector<8x32xf32>
    %cst_30 = arith.constant 1.000000e+00 : f32
    %87 = vector.broadcast %cst_30 : f32 to vector<8x32xf32>
    %88 = arith.addf %87, %86 : vector<8x32xf32>
    %89 = arith.divf %87, %88 : vector<8x32xf32>
    %90 = vector.extract_strided_slice %83 {offsets = [0, 32], sizes = [8, 32], strides = [1, 1]} : vector<8x128xf32> to vector<8x32xf32>
    %91 = arith.negf %90 : vector<8x32xf32>
    %92 = math.exp %91 : vector<8x32xf32>
    %cst_31 = arith.constant 1.000000e+00 : f32
    %93 = vector.broadcast %cst_31 : f32 to vector<8x32xf32>
    %94 = arith.addf %93, %92 : vector<8x32xf32>
    %95 = arith.divf %93, %94 : vector<8x32xf32>
    %96 = vector.extract_strided_slice %83 {offsets = [0, 64], sizes = [8, 32], strides = [1, 1]} : vector<8x128xf32> to vector<8x32xf32>
    %97 = math.tanh %96 : vector<8x32xf32>
    %98 = vector.extract_strided_slice %83 {offsets = [0, 96], sizes = [8, 32], strides = [1, 1]} : vector<8x128xf32> to vector<8x32xf32>
    %99 = arith.negf %98 : vector<8x32xf32>
    %100 = math.exp %99 : vector<8x32xf32>
    %cst_32 = arith.constant 1.000000e+00 : f32
    %101 = vector.broadcast %cst_32 : f32 to vector<8x32xf32>
    %102 = arith.addf %101, %100 : vector<8x32xf32>
    %103 = arith.divf %101, %102 : vector<8x32xf32>
    %104 = arith.mulf %95, %73 : vector<8x32xf32>
    %105 = arith.mulf %89, %97 : vector<8x32xf32>
    %106 = arith.addf %104, %105 : vector<8x32xf32>
    %107 = math.tanh %106 : vector<8x32xf32>
    %108 = arith.mulf %103, %107 : vector<8x32xf32>
    %c3_i32 = arith.constant 3 : i32
    %c8_i32_33 = arith.constant 8 : i32
    %109 = arith.muli %c3_i32, %c8_i32_33 : i32
    %110 = tpu.assume_multiple %109, 8 : i32
    %111 = arith.index_cast %110 : i32 to index
    %c0_34 = arith.constant 0 : index
    %112 = vector.load %arg8[%111, %c0_34] : memref<64x128xf32, #tpu.memory_space<vmem>>, vector<8x128xf32>
    %113 = arith.truncf %108 : vector<8x32xf32> to vector<8x32xbf16>
    %c0_35 = arith.constant 0 : index
    %c0_36 = arith.constant 0 : index
    %114 = vector.load %arg3[%c0_35, %c0_36] : memref<32x128xbf16, #tpu.memory_space<vmem>>, vector<32x128xbf16>
    %cst_37 = arith.constant dense<0.000000e+00> : vector<8x128xf32>
    %115 = tpu.matmul %113, %114, %cst_37 {dimension_numbers = #tpu.dot_dimension_numbers<[1], [0], [0], [1], [0, 0, 1, 1], [], []>} : vector<8x32xbf16>, vector<32x128xbf16>, vector<8x128xf32> -> vector<8x128xf32>
    %116 = arith.addf %112, %115 : vector<8x128xf32>
    %117 = vector.extract_strided_slice %116 {offsets = [0, 0], sizes = [8, 32], strides = [1, 1]} : vector<8x128xf32> to vector<8x32xf32>
    %118 = arith.negf %117 : vector<8x32xf32>
    %119 = math.exp %118 : vector<8x32xf32>
    %cst_38 = arith.constant 1.000000e+00 : f32
    %120 = vector.broadcast %cst_38 : f32 to vector<8x32xf32>
    %121 = arith.addf %120, %119 : vector<8x32xf32>
    %122 = arith.divf %120, %121 : vector<8x32xf32>
    %123 = vector.extract_strided_slice %116 {offsets = [0, 32], sizes = [8, 32], strides = [1, 1]} : vector<8x128xf32> to vector<8x32xf32>
    %124 = arith.negf %123 : vector<8x32xf32>
    %125 = math.exp %124 : vector<8x32xf32>
    %cst_39 = arith.constant 1.000000e+00 : f32
    %126 = vector.broadcast %cst_39 : f32 to vector<8x32xf32>
    %127 = arith.addf %126, %125 : vector<8x32xf32>
    %128 = arith.divf %126, %127 : vector<8x32xf32>
    %129 = vector.extract_strided_slice %116 {offsets = [0, 64], sizes = [8, 32], strides = [1, 1]} : vector<8x128xf32> to vector<8x32xf32>
    %130 = math.tanh %129 : vector<8x32xf32>
    %131 = vector.extract_strided_slice %116 {offsets = [0, 96], sizes = [8, 32], strides = [1, 1]} : vector<8x128xf32> to vector<8x32xf32>
    %132 = arith.negf %131 : vector<8x32xf32>
    %133 = math.exp %132 : vector<8x32xf32>
    %cst_40 = arith.constant 1.000000e+00 : f32
    %134 = vector.broadcast %cst_40 : f32 to vector<8x32xf32>
    %135 = arith.addf %134, %133 : vector<8x32xf32>
    %136 = arith.divf %134, %135 : vector<8x32xf32>
    %137 = arith.mulf %128, %106 : vector<8x32xf32>
    %138 = arith.mulf %122, %130 : vector<8x32xf32>
    %139 = arith.addf %137, %138 : vector<8x32xf32>
    %140 = math.tanh %139 : vector<8x32xf32>
    %141 = arith.mulf %136, %140 : vector<8x32xf32>
    %c4_i32 = arith.constant 4 : i32
    %c8_i32_41 = arith.constant 8 : i32
    %142 = arith.muli %c4_i32, %c8_i32_41 : i32
    %143 = tpu.assume_multiple %142, 8 : i32
    %144 = arith.index_cast %143 : i32 to index
    %c0_42 = arith.constant 0 : index
    %145 = vector.load %arg8[%144, %c0_42] : memref<64x128xf32, #tpu.memory_space<vmem>>, vector<8x128xf32>
    %146 = arith.truncf %141 : vector<8x32xf32> to vector<8x32xbf16>
    %c0_43 = arith.constant 0 : index
    %c0_44 = arith.constant 0 : index
    %147 = vector.load %arg3[%c0_43, %c0_44] : memref<32x128xbf16, #tpu.memory_space<vmem>>, vector<32x128xbf16>
    %cst_45 = arith.constant dense<0.000000e+00> : vector<8x128xf32>
    %148 = tpu.matmul %146, %147, %cst_45 {dimension_numbers = #tpu.dot_dimension_numbers<[1], [0], [0], [1], [0, 0, 1, 1], [], []>} : vector<8x32xbf16>, vector<32x128xbf16>, vector<8x128xf32> -> vector<8x128xf32>
    %149 = arith.addf %145, %148 : vector<8x128xf32>
    %150 = vector.extract_strided_slice %149 {offsets = [0, 0], sizes = [8, 32], strides = [1, 1]} : vector<8x128xf32> to vector<8x32xf32>
    %151 = arith.negf %150 : vector<8x32xf32>
    %152 = math.exp %151 : vector<8x32xf32>
    %cst_46 = arith.constant 1.000000e+00 : f32
    %153 = vector.broadcast %cst_46 : f32 to vector<8x32xf32>
    %154 = arith.addf %153, %152 : vector<8x32xf32>
    %155 = arith.divf %153, %154 : vector<8x32xf32>
    %156 = vector.extract_strided_slice %149 {offsets = [0, 32], sizes = [8, 32], strides = [1, 1]} : vector<8x128xf32> to vector<8x32xf32>
    %157 = arith.negf %156 : vector<8x32xf32>
    %158 = math.exp %157 : vector<8x32xf32>
    %cst_47 = arith.constant 1.000000e+00 : f32
    %159 = vector.broadcast %cst_47 : f32 to vector<8x32xf32>
    %160 = arith.addf %159, %158 : vector<8x32xf32>
    %161 = arith.divf %159, %160 : vector<8x32xf32>
    %162 = vector.extract_strided_slice %149 {offsets = [0, 64], sizes = [8, 32], strides = [1, 1]} : vector<8x128xf32> to vector<8x32xf32>
    %163 = math.tanh %162 : vector<8x32xf32>
    %164 = vector.extract_strided_slice %149 {offsets = [0, 96], sizes = [8, 32], strides = [1, 1]} : vector<8x128xf32> to vector<8x32xf32>
    %165 = arith.negf %164 : vector<8x32xf32>
    %166 = math.exp %165 : vector<8x32xf32>
    %cst_48 = arith.constant 1.000000e+00 : f32
    %167 = vector.broadcast %cst_48 : f32 to vector<8x32xf32>
    %168 = arith.addf %167, %166 : vector<8x32xf32>
    %169 = arith.divf %167, %168 : vector<8x32xf32>
    %170 = arith.mulf %161, %139 : vector<8x32xf32>
    %171 = arith.mulf %155, %163 : vector<8x32xf32>
    %172 = arith.addf %170, %171 : vector<8x32xf32>
    %173 = math.tanh %172 : vector<8x32xf32>
    %174 = arith.mulf %169, %173 : vector<8x32xf32>
    %c5_i32 = arith.constant 5 : i32
    %c8_i32_49 = arith.constant 8 : i32
    %175 = arith.muli %c5_i32, %c8_i32_49 : i32
    %176 = tpu.assume_multiple %175, 8 : i32
    %177 = arith.index_cast %176 : i32 to index
    %c0_50 = arith.constant 0 : index
    %178 = vector.load %arg8[%177, %c0_50] : memref<64x128xf32, #tpu.memory_space<vmem>>, vector<8x128xf32>
    %179 = arith.truncf %174 : vector<8x32xf32> to vector<8x32xbf16>
    %c0_51 = arith.constant 0 : index
    %c0_52 = arith.constant 0 : index
    %180 = vector.load %arg3[%c0_51, %c0_52] : memref<32x128xbf16, #tpu.memory_space<vmem>>, vector<32x128xbf16>
    %cst_53 = arith.constant dense<0.000000e+00> : vector<8x128xf32>
    %181 = tpu.matmul %179, %180, %cst_53 {dimension_numbers = #tpu.dot_dimension_numbers<[1], [0], [0], [1], [0, 0, 1, 1], [], []>} : vector<8x32xbf16>, vector<32x128xbf16>, vector<8x128xf32> -> vector<8x128xf32>
    %182 = arith.addf %178, %181 : vector<8x128xf32>
    %183 = vector.extract_strided_slice %182 {offsets = [0, 0], sizes = [8, 32], strides = [1, 1]} : vector<8x128xf32> to vector<8x32xf32>
    %184 = arith.negf %183 : vector<8x32xf32>
    %185 = math.exp %184 : vector<8x32xf32>
    %cst_54 = arith.constant 1.000000e+00 : f32
    %186 = vector.broadcast %cst_54 : f32 to vector<8x32xf32>
    %187 = arith.addf %186, %185 : vector<8x32xf32>
    %188 = arith.divf %186, %187 : vector<8x32xf32>
    %189 = vector.extract_strided_slice %182 {offsets = [0, 32], sizes = [8, 32], strides = [1, 1]} : vector<8x128xf32> to vector<8x32xf32>
    %190 = arith.negf %189 : vector<8x32xf32>
    %191 = math.exp %190 : vector<8x32xf32>
    %cst_55 = arith.constant 1.000000e+00 : f32
    %192 = vector.broadcast %cst_55 : f32 to vector<8x32xf32>
    %193 = arith.addf %192, %191 : vector<8x32xf32>
    %194 = arith.divf %192, %193 : vector<8x32xf32>
    %195 = vector.extract_strided_slice %182 {offsets = [0, 64], sizes = [8, 32], strides = [1, 1]} : vector<8x128xf32> to vector<8x32xf32>
    %196 = math.tanh %195 : vector<8x32xf32>
    %197 = vector.extract_strided_slice %182 {offsets = [0, 96], sizes = [8, 32], strides = [1, 1]} : vector<8x128xf32> to vector<8x32xf32>
    %198 = arith.negf %197 : vector<8x32xf32>
    %199 = math.exp %198 : vector<8x32xf32>
    %cst_56 = arith.constant 1.000000e+00 : f32
    %200 = vector.broadcast %cst_56 : f32 to vector<8x32xf32>
    %201 = arith.addf %200, %199 : vector<8x32xf32>
    %202 = arith.divf %200, %201 : vector<8x32xf32>
    %203 = arith.mulf %194, %172 : vector<8x32xf32>
    %204 = arith.mulf %188, %196 : vector<8x32xf32>
    %205 = arith.addf %203, %204 : vector<8x32xf32>
    %206 = math.tanh %205 : vector<8x32xf32>
    %207 = arith.mulf %202, %206 : vector<8x32xf32>
    %c6_i32 = arith.constant 6 : i32
    %c8_i32_57 = arith.constant 8 : i32
    %208 = arith.muli %c6_i32, %c8_i32_57 : i32
    %209 = tpu.assume_multiple %208, 8 : i32
    %210 = arith.index_cast %209 : i32 to index
    %c0_58 = arith.constant 0 : index
    %211 = vector.load %arg8[%210, %c0_58] : memref<64x128xf32, #tpu.memory_space<vmem>>, vector<8x128xf32>
    %212 = arith.truncf %207 : vector<8x32xf32> to vector<8x32xbf16>
    %c0_59 = arith.constant 0 : index
    %c0_60 = arith.constant 0 : index
    %213 = vector.load %arg3[%c0_59, %c0_60] : memref<32x128xbf16, #tpu.memory_space<vmem>>, vector<32x128xbf16>
    %cst_61 = arith.constant dense<0.000000e+00> : vector<8x128xf32>
    %214 = tpu.matmul %212, %213, %cst_61 {dimension_numbers = #tpu.dot_dimension_numbers<[1], [0], [0], [1], [0, 0, 1, 1], [], []>} : vector<8x32xbf16>, vector<32x128xbf16>, vector<8x128xf32> -> vector<8x128xf32>
    %215 = arith.addf %211, %214 : vector<8x128xf32>
    %216 = vector.extract_strided_slice %215 {offsets = [0, 0], sizes = [8, 32], strides = [1, 1]} : vector<8x128xf32> to vector<8x32xf32>
    %217 = arith.negf %216 : vector<8x32xf32>
    %218 = math.exp %217 : vector<8x32xf32>
    %cst_62 = arith.constant 1.000000e+00 : f32
    %219 = vector.broadcast %cst_62 : f32 to vector<8x32xf32>
    %220 = arith.addf %219, %218 : vector<8x32xf32>
    %221 = arith.divf %219, %220 : vector<8x32xf32>
    %222 = vector.extract_strided_slice %215 {offsets = [0, 32], sizes = [8, 32], strides = [1, 1]} : vector<8x128xf32> to vector<8x32xf32>
    %223 = arith.negf %222 : vector<8x32xf32>
    %224 = math.exp %223 : vector<8x32xf32>
    %cst_63 = arith.constant 1.000000e+00 : f32
    %225 = vector.broadcast %cst_63 : f32 to vector<8x32xf32>
    %226 = arith.addf %225, %224 : vector<8x32xf32>
    %227 = arith.divf %225, %226 : vector<8x32xf32>
    %228 = vector.extract_strided_slice %215 {offsets = [0, 64], sizes = [8, 32], strides = [1, 1]} : vector<8x128xf32> to vector<8x32xf32>
    %229 = math.tanh %228 : vector<8x32xf32>
    %230 = vector.extract_strided_slice %215 {offsets = [0, 96], sizes = [8, 32], strides = [1, 1]} : vector<8x128xf32> to vector<8x32xf32>
    %231 = arith.negf %230 : vector<8x32xf32>
    %232 = math.exp %231 : vector<8x32xf32>
    %cst_64 = arith.constant 1.000000e+00 : f32
    %233 = vector.broadcast %cst_64 : f32 to vector<8x32xf32>
    %234 = arith.addf %233, %232 : vector<8x32xf32>
    %235 = arith.divf %233, %234 : vector<8x32xf32>
    %236 = arith.mulf %227, %205 : vector<8x32xf32>
    %237 = arith.mulf %221, %229 : vector<8x32xf32>
    %238 = arith.addf %236, %237 : vector<8x32xf32>
    %239 = math.tanh %238 : vector<8x32xf32>
    %240 = arith.mulf %235, %239 : vector<8x32xf32>
    %c7_i32 = arith.constant 7 : i32
    %c8_i32_65 = arith.constant 8 : i32
    %241 = arith.muli %c7_i32, %c8_i32_65 : i32
    %242 = tpu.assume_multiple %241, 8 : i32
    %243 = arith.index_cast %242 : i32 to index
    %c0_66 = arith.constant 0 : index
    %244 = vector.load %arg8[%243, %c0_66] : memref<64x128xf32, #tpu.memory_space<vmem>>, vector<8x128xf32>
    %245 = arith.truncf %240 : vector<8x32xf32> to vector<8x32xbf16>
    %c0_67 = arith.constant 0 : index
    %c0_68 = arith.constant 0 : index
    %246 = vector.load %arg3[%c0_67, %c0_68] : memref<32x128xbf16, #tpu.memory_space<vmem>>, vector<32x128xbf16>
    %cst_69 = arith.constant dense<0.000000e+00> : vector<8x128xf32>
    %247 = tpu.matmul %245, %246, %cst_69 {dimension_numbers = #tpu.dot_dimension_numbers<[1], [0], [0], [1], [0, 0, 1, 1], [], []>} : vector<8x32xbf16>, vector<32x128xbf16>, vector<8x128xf32> -> vector<8x128xf32>
    %248 = arith.addf %244, %247 : vector<8x128xf32>
    %249 = vector.extract_strided_slice %248 {offsets = [0, 0], sizes = [8, 32], strides = [1, 1]} : vector<8x128xf32> to vector<8x32xf32>
    %250 = arith.negf %249 : vector<8x32xf32>
    %251 = math.exp %250 : vector<8x32xf32>
    %cst_70 = arith.constant 1.000000e+00 : f32
    %252 = vector.broadcast %cst_70 : f32 to vector<8x32xf32>
    %253 = arith.addf %252, %251 : vector<8x32xf32>
    %254 = arith.divf %252, %253 : vector<8x32xf32>
    %255 = vector.extract_strided_slice %248 {offsets = [0, 32], sizes = [8, 32], strides = [1, 1]} : vector<8x128xf32> to vector<8x32xf32>
    %256 = arith.negf %255 : vector<8x32xf32>
    %257 = math.exp %256 : vector<8x32xf32>
    %cst_71 = arith.constant 1.000000e+00 : f32
    %258 = vector.broadcast %cst_71 : f32 to vector<8x32xf32>
    %259 = arith.addf %258, %257 : vector<8x32xf32>
    %260 = arith.divf %258, %259 : vector<8x32xf32>
    %261 = vector.extract_strided_slice %248 {offsets = [0, 64], sizes = [8, 32], strides = [1, 1]} : vector<8x128xf32> to vector<8x32xf32>
    %262 = math.tanh %261 : vector<8x32xf32>
    %263 = vector.extract_strided_slice %248 {offsets = [0, 96], sizes = [8, 32], strides = [1, 1]} : vector<8x128xf32> to vector<8x32xf32>
    %264 = arith.negf %263 : vector<8x32xf32>
    %265 = math.exp %264 : vector<8x32xf32>
    %cst_72 = arith.constant 1.000000e+00 : f32
    %266 = vector.broadcast %cst_72 : f32 to vector<8x32xf32>
    %267 = arith.addf %266, %265 : vector<8x32xf32>
    %268 = arith.divf %266, %267 : vector<8x32xf32>
    %269 = arith.mulf %260, %238 : vector<8x32xf32>
    %270 = arith.mulf %254, %262 : vector<8x32xf32>
    %271 = arith.addf %269, %270 : vector<8x32xf32>
    %272 = math.tanh %271 : vector<8x32xf32>
    %273 = arith.mulf %268, %272 : vector<8x32xf32>
    %c8_i32_73 = arith.constant 8 : i32
    %274 = arith.truncf %273 : vector<8x32xf32> to vector<8x32xbf16>
    %c0_74 = arith.constant 0 : index
    %c0_75 = arith.constant 0 : index
    %275 = vector.load %arg5[%c0_74, %c0_75] : memref<32x128xbf16, #tpu.memory_space<vmem>>, vector<32x128xbf16>
    %cst_76 = arith.constant dense<0.000000e+00> : vector<8x128xf32>
    %276 = tpu.matmul %274, %275, %cst_76 {dimension_numbers = #tpu.dot_dimension_numbers<[1], [0], [0], [1], [0, 0, 1, 1], [], []>} : vector<8x32xbf16>, vector<32x128xbf16>, vector<8x128xf32> -> vector<8x128xf32>
    %c0_77 = arith.constant 0 : index
    %c0_78 = arith.constant 0 : index
    %277 = vector.load %arg6[%c0_77, %c0_78] : memref<1x128xf32, #tpu.memory_space<vmem>>, vector<1x128xf32>
    %278 = vector.broadcast %277 : vector<1x128xf32> to vector<8x128xf32>
    %279 = arith.addf %276, %278 : vector<8x128xf32>
    %280 = arith.negf %279 : vector<8x128xf32>
    %281 = math.exp %280 : vector<8x128xf32>
    %cst_79 = arith.constant 1.000000e+00 : f32
    %282 = vector.broadcast %cst_79 : f32 to vector<8x128xf32>
    %283 = arith.addf %282, %281 : vector<8x128xf32>
    %284 = arith.divf %282, %283 : vector<8x128xf32>
    %c0_80 = arith.constant 0 : index
    %c0_81 = arith.constant 0 : index
    %285 = vector.load %arg7[%c0_80, %c0_81] : memref<8x128xf32, #tpu.memory_space<vmem>>, vector<8x128xf32>
    tpu.vector_store %arg7[%c0_80, %c0_81], %284 {strides = array<i32>} : memref<8x128xf32, #tpu.memory_space<vmem>>, vector<8x128xf32>,
    return
  }
  func.func @transform_0(%arg0: i32) -> (i32, i32, i32) {
    %c0_i32 = arith.constant 0 : i32
    %c0_i32_0 = arith.constant 0 : i32
    %c0_i32_1 = arith.constant 0 : i32
    %c0_i32_2 = arith.constant 0 : i32
    return %c0_i32, %c0_i32_0, %c0_i32_1 : i32, i32, i32
  }
  func.func @transform_1(%arg0: i32) -> (i32, i32) {
    %c0_i32 = arith.constant 0 : i32
    %c0_i32_0 = arith.constant 0 : i32
    %c0_i32_1 = arith.constant 0 : i32
    return %c0_i32, %c0_i32_0 : i32, i32
  }
  func.func @transform_2(%arg0: i32) -> (i32, i32) {
    %c0_i32 = arith.constant 0 : i32
    %c0_i32_0 = arith.constant 0 : i32
    %c0_i32_1 = arith.constant 0 : i32
    return %c0_i32, %c0_i32_0 : i32, i32
  }
  func.func @transform_3(%arg0: i32) -> (i32, i32) {
    %c0_i32 = arith.constant 0 : i32
    %c0_i32_0 = arith.constant 0 : i32
    %c0_i32_1 = arith.constant 0 : i32
    return %c0_i32, %c0_i32_0 : i32, i32
  }
  func.func @transform_4(%arg0: i32) -> (i32, i32) {
    %c0_i32 = arith.constant 0 : i32
    %c0_i32_0 = arith.constant 0 : i32
    %c0_i32_1 = arith.constant 0 : i32
    return %c0_i32, %c0_i32_0 : i32, i32
  }
  func.func @transform_5(%arg0: i32) -> (i32, i32) {
    %c0_i32 = arith.constant 0 : i32
    %c0_i32_0 = arith.constant 0 : i32
    %c0_i32_1 = arith.constant 0 : i32
    return %c0_i32, %c0_i32_0 : i32, i32
  }
  func.func @transform_6(%arg0: i32) -> (i32, i32) {
    %c0_i32 = arith.constant 0 : i32
    %c0_i32_0 = arith.constant 0 : i32
    %c0_i32_1 = arith.constant 0 : i32
    return %c0_i32, %c0_i32_0 : i32, i32
  }
}

</mosaic_0001>

<llo_original>
// kernel: tpu_custom_call.1
$region0: #{tpu_custom_call.1}
  #allocation0 [shape = 'u32[]', space=smem, size = 0x4, offset = 0x4, fixed_abs, tag = 'smem constant byte address 0x4 - core index']
  #allocation1 [shape = 'u32[72,128]{1,0:T(1,128)}', space=vmem, size = 0x9000, scoped, tag = 'internal scratch']
  #allocation2 [shape = 'f32[64,128]{1,0:T(8,128)}', space=vmem, size = 0x8000, scoped, tag = 'scratch operand']
  %s0 = inlined_call_operand.hbm [shape: bf16[8,8,128], index: 0, kind: input, shape index: {}]
  %s1 = inlined_call_operand.hbm [shape: bf16[128,128], index: 1, kind: input, shape index: {}]
  %s2 = inlined_call_operand.hbm [shape: bf16[32,128], index: 2, kind: input, shape index: {}]
  %s3 = inlined_call_operand.vmem [shape: f32[1,128], index: 3, kind: input, shape index: {}]
  %s4 = inlined_call_operand.hbm [shape: bf16[32,128], index: 4, kind: input, shape index: {}]
  %s5 = inlined_call_operand.vmem [shape: f32[1,128], index: 5, kind: input, shape index: {}]
  %s6 = inlined_call_operand.hbm [shape: f32[8,128], index: 6, kind: output, shape index: {}]
  %s7 = sld [smem:[#allocation0]]
  $region50: #{tpu_custom_call.1} parent=0
    _
  %s9 = ssub.s32 1, %s7
  %s10 = scalar_select 0, %s9, %s7
  $region1: #{tpu_custom_call.1} parent=0
    #allocation3 [shape = 'u8[16384]{0}', space=vmem, size = 0x4000, scoped, tag = 'input window, operand 0, single buffered']
    #allocation4 [shape = 's32[1]{0}', space=sflag, size = 0x4, scoped, tag = 'scoped memory for tpu_custom_call.1']
    #allocation5 [shape = 's32[1]{0}', space=sflag, size = 0x4, scoped, tag = 'scoped memory for tpu_custom_call.1']
    #allocation6 [shape = 'u8[32768]{0}', space=vmem, size = 0x8000, scoped, tag = 'input window, operand 1, single buffered']
    #allocation7 [shape = 's32[1]{0}', space=sflag, size = 0x4, scoped, tag = 'scoped memory for tpu_custom_call.1']
    #allocation8 [shape = 'u8[8192]{0}', space=vmem, size = 0x2000, scoped, tag = 'input window, operand 2, single buffered']
    #allocation9 [shape = 'u8[8192]{0}', space=vmem, size = 0x2000, scoped, tag = 'input window, operand 4, single buffered']
    #allocation10 [shape = 's32[1]{0}', space=sflag, size = 0x4, scoped, tag = 'scoped memory for tpu_custom_call.1']
    #allocation11 [shape = 'u8[4096]{0}', space=vmem, size = 0x1000, scoped, tag = 'output window, operand 0, single buffered']
    %11 = vsyncpa [#allocation4], 0
    %12 = vsyncpa [#allocation7], 0
    %13 = vsyncpa [#allocation10], 0
    %14 = vsyncpa [#allocation5], 0
    // Predicated region
    $region2: #{tpu_custom_call.1} parent=1 // pred_check
      _
    $region3: #{tpu_custom_call.1} parent=1 // pred_check_branch
      %16 = sbr.rel (0) target = $region5
    $region4: #{tpu_custom_call.1} parent=1 // pred_region
      %18 = vsyncadd [#allocation4], 0
      %s19 = sshll.u32 %s0, 4
      %s20 = int_to_ptr.hbm [resolvable:$true] %s19
      %s21 = sshll.u32 [#allocation3], 4
      %s22 = int_to_ptr.vmem [resolvable:$true] %s21
      %27 = dma.hbm_to_vmem [thread:$0]  %s20, 512, %s22, [#allocation4], 64, 64, 4
    $region5: #{tpu_custom_call.1} parent=1 // pred_fallthru
      _
    // Predicated region
    $region6: #{tpu_custom_call.1} parent=1 // pred_check
      _
    $region7: #{tpu_custom_call.1} parent=1 // pred_check_branch
      %29 = sbr.rel (0) target = $region9
    $region8: #{tpu_custom_call.1} parent=1 // pred_region
      %31 = vsyncadd [#allocation7], 0
      %s32 = sshll.u32 %s1, 4
      %s33 = int_to_ptr.hbm [resolvable:$true] %s32
      %s34 = sshll.u32 [#allocation6], 4
      %s35 = int_to_ptr.vmem [resolvable:$true] %s34
      %40 = dma.hbm_to_vmem [thread:$0]  %s33, 1024, %s35, [#allocation7], 64, 64, 4
    $region9: #{tpu_custom_call.1} parent=1 // pred_fallthru
      _
    // Predicated region
    $region10: #{tpu_custom_call.1} parent=1 // pred_check
      _
    $region11: #{tpu_custom_call.1} parent=1 // pred_check_branch
      %42 = sbr.rel (0) target = $region13
    $region12: #{tpu_custom_call.1} parent=1 // pred_region
      %44 = vsyncadd [#allocation7], 0
      %s45 = sshll.u32 %s2, 4
      %s46 = int_to_ptr.hbm [resolvable:$true] %s45
      %s47 = sshll.u32 [#allocation8], 4
      %s48 = int_to_ptr.vmem [resolvable:$true] %s47
      %53 = dma.hbm_to_vmem [thread:$0]  %s46, 256, %s48, [#allocation7], 64, 64, 4
    $region13: #{tpu_custom_call.1} parent=1 // pred_fallthru
      _
    // Predicated region
    $region14: #{tpu_custom_call.1} parent=1 // pred_check
      _
    $region15: #{tpu_custom_call.1} parent=1 // pred_check_branch
      %55 = sbr.rel (0) target = $region17
    $region16: #{tpu_custom_call.1} parent=1 // pred_region
      _
    $region17: #{tpu_custom_call.1} parent=1 // pred_fallthru
      _
    // Predicated region
    $region18: #{tpu_custom_call.1} parent=1 // pred_check
      _
    $region19: #{tpu_custom_call.1} parent=1 // pred_check_branch
      %57 = sbr.rel (0) target = $region21
    $region20: #{tpu_custom_call.1} parent=1 // pred_region
      %59 = vsyncadd [#allocation10], 0
      %s60 = sshll.u32 %s4, 4
      %s61 = int_to_ptr.hbm [resolvable:$true] %s60
      %s62 = sshll.u32 [#allocation9], 4
      %s63 = int_to_ptr.vmem [resolvable:$true] %s62
      %68 = dma.hbm_to_vmem [thread:$0]  %s61, 256, %s63, [#allocation10], 64, 64, 4
    $region21: #{tpu_custom_call.1} parent=1 // pred_fallthru
      _
    // Predicated region
    $region22: #{tpu_custom_call.1} parent=1 // pred_check
      _
    $region23: #{tpu_custom_call.1} parent=1 // pred_check_branch
      %70 = sbr.rel (0) target = $region25
    $region24: #{tpu_custom_call.1} parent=1 // pred_region
      _
    $region25: #{tpu_custom_call.1} parent=1 // pred_fallthru
      _
    // Predicated region
    $region26: #{tpu_custom_call.1} parent=1 // pred_check
      _
    $region27: #{tpu_custom_call.1} parent=1 // pred_check_branch
      %72 = sbr.rel (0) target = $region29
    $region28: #{tpu_custom_call.1} parent=1 // pred_region
      %74 = dma.done [#allocation4], 512
    $region29: #{tpu_custom_call.1} parent=1 // pred_fallthru
      _
    // Predicated region
    $region30: #{tpu_custom_call.1} parent=1 // pred_check
      _
    $region31: #{tpu_custom_call.1} parent=1 // pred_check_branch
      %76 = sbr.rel (0) target = $region33
    $region32: #{tpu_custom_call.1} parent=1 // pred_region
      %78 = dma.done [#allocation7], 1024
    $region33: #{tpu_custom_call.1} parent=1 // pred_fallthru
      _
    // Predicated region
    $region34: #{tpu_custom_call.1} parent=1 // pred_check
      _
    $region35: #{tpu_custom_call.1} parent=1 // pred_check_branch
      %80 = sbr.rel (0) target = $region37
    $region36: #{tpu_custom_call.1} parent=1 // pred_region
      %82 = dma.done [#allocation7], 256
    $region37: #{tpu_custom_call.1} parent=1 // pred_fallthru
      _
    // Predicated region
    $region38: #{tpu_custom_call.1} parent=1 // pred_check
      _
    $region39: #{tpu_custom_call.1} parent=1 // pred_check_branch
      %84 = sbr.rel (0) target = $region41
    $region40: #{tpu_custom_call.1} parent=1 // pred_region
      %86 = dma.done [#allocation10], 256
    $region41: #{tpu_custom_call.1} parent=1 // pred_fallthru
      _
    %v88 = vld [vmem:[#allocation3] sm:$0xf]
    %v89 = vld [vmem:[#allocation3 + $0x4] sm:$0xf]
    %v90 = vld [vmem:[#allocation3 + $0x8] sm:$0xf]
    %v91 = vld [vmem:[#allocation3 + $0xc] sm:$0xf]
    %v92 = vld [vmem:[#allocation3 + $0x10] sm:$0xf]
    %v93 = vld [vmem:[#allocation3 + $0x14] sm:$0xf]
    %v94 = vld [vmem:[#allocation3 + $0x18] sm:$0xf]
    %v95 = vld [vmem:[#allocation3 + $0x1c] sm:$0xf]
    %v96 = vld [vmem:[#allocation6] sm:$0xf]
    %v97 = vld [vmem:[#allocation6 + $0x4] sm:$0xf]
    %v98 = vld [vmem:[#allocation6 + $0x8] sm:$0xf]
    %v99 = vld [vmem:[#allocation6 + $0xc] sm:$0xf]
    %v100 = vld [vmem:[#allocation6 + $0x10] sm:$0xf]
    %v101 = vld [vmem:[#allocation6 + $0x14] sm:$0xf]
    %v102 = vld [vmem:[#allocation6 + $0x18] sm:$0xf]
    %v103 = vld [vmem:[#allocation6 + $0x1c] sm:$0xf]
    %v104 = vld [vmem:[#allocation6 + $0x20] sm:$0xf]
    %v105 = vld [vmem:[#allocation6 + $0x24] sm:$0xf]
    %v106 = vld [vmem:[#allocation6 + $0x28] sm:$0xf]
    %v107 = vld [vmem:[#allocation6 + $0x2c] sm:$0xf]
    %v108 = vld [vmem:[#allocation6 + $0x30] sm:$0xf]
    %v109 = vld [vmem:[#allocation6 + $0x34] sm:$0xf]
    %v110 = vld [vmem:[#allocation6 + $0x38] sm:$0xf]
    %v111 = vld [vmem:[#allocation6 + $0x3c] sm:$0xf]
    %v112 = vld [vmem:[%s3] sm:$0x1]
    %v114 = vperm.slane %v112, 0
    %v124 = vunpack.c.l.b16 %v88
    %v125 = vunpack.c.l.b16 %v89
    %v126 = vunpack.c.l.b16 %v90
    %v127 = vunpack.c.l.b16 %v91
    %v128 = vunpack.c.l.b16 %v92
    %v129 = vunpack.c.l.b16 %v93
    %v130 = vunpack.c.l.b16 %v94
    %v131 = vunpack.c.l.b16 %v95
    %v132 = vpack.c.b16 %v125, %v124
    %v133 = vpack.c.b16 %v127, %v126
    %v134 = vpack.c.b16 %v129, %v128
    %v135 = vpack.c.b16 %v131, %v130
    %v156 = vunpack.c.l.b16 %v96
    %v157 = vunpack.c.l.b16 %v97
    %v158 = vunpack.c.l.b16 %v98
    %v159 = vunpack.c.l.b16 %v99
    %v160 = vunpack.c.l.b16 %v100
    %v161 = vunpack.c.l.b16 %v101
    %v162 = vunpack.c.l.b16 %v102
    %v163 = vunpack.c.l.b16 %v103
    %v164 = vunpack.c.l.b16 %v104
    %v165 = vunpack.c.l.b16 %v105
    %v166 = vunpack.c.l.b16 %v106
    %v167 = vunpack.c.l.b16 %v107
    %v168 = vunpack.c.l.b16 %v108
    %v169 = vunpack.c.l.b16 %v109
    %v170 = vunpack.c.l.b16 %v110
    %v171 = vunpack.c.l.b16 %v111
    %v172 = vpack.c.b16 %v157, %v156
    %v173 = vpack.c.b16 %v159, %v158
    %v174 = vpack.c.b16 %v161, %v160
    %v175 = vpack.c.b16 %v163, %v162
    %v176 = vpack.c.b16 %v165, %v164
    %v177 = vpack.c.b16 %v167, %v166
    %v178 = vpack.c.b16 %v169, %v168
    %v179 = vpack.c.b16 %v171, %v170
    %188 = vmatpush.bf16.msra.mxu0 %v179
    %189 = vmatpush.bf16.msra.mxu0 %v178
    %190 = vmatpush.bf16.msra.mxu0 %v177
    %191 = vmatpush.bf16.msra.mxu0 %v176
    %192 = vmatpush.bf16.msra.mxu0 %v175
    %193 = vmatpush.bf16.msra.mxu0 %v174
    %194 = vmatpush.bf16.msra.mxu0 %v173
    %195 = vmatpush.bf16.msra.mxu0 %v172
    %196 = vmatmul.bf16.gmra.mxu0 %v132
    %v197 = vpop.f32.mrf.mxu0
    %v198 = vadd.f32 %v114, %v197
    %v199 = vpop.f32.mrf.mxu0
    %v200 = vadd.f32 %v114, %v199
    %201 = vmatmul.bf16.gmra.mxu0 %v133
    %v202 = vpop.f32.mrf.mxu0
    %v203 = vadd.f32 %v114, %v202
    %v204 = vpop.f32.mrf.mxu0
    %v205 = vadd.f32 %v114, %v204
    %206 = vmatmul.bf16.gmra.mxu0 %v134
    %v207 = vpop.f32.mrf.mxu0
    %v208 = vadd.f32 %v114, %v207
    %v209 = vpop.f32.mrf.mxu0
    %v210 = vadd.f32 %v114, %v209
    %211 = vmatmul.bf16.gmra.mxu0 %v135
    %v212 = vpop.f32.mrf.mxu0
    %v213 = vadd.f32 %v114, %v212
    %v214 = vpop.f32.mrf.mxu0
    %v215 = vadd.f32 %v114, %v214
    %216 = vdwg.mxu0
    %217 = vst [vmem:[#allocation2] sm:$0xff] %v198
    %218 = vst [vmem:[#allocation2 + $0x8] sm:$0xff] %v200
    %219 = vst [vmem:[#allocation2 + $0x10] sm:$0xff] %v203
    %220 = vst [vmem:[#allocation2 + $0x18] sm:$0xff] %v205
    %221 = vst [vmem:[#allocation2 + $0x20] sm:$0xff] %v208
    %222 = vst [vmem:[#allocation2 + $0x28] sm:$0xff] %v210
    %223 = vst [vmem:[#allocation2 + $0x30] sm:$0xff] %v213
    %224 = vst [vmem:[#allocation2 + $0x38] sm:$0xff] %v215
    %v225 = vld [vmem:[#allocation2] sm:$0xff]
    %v226 = vld [vmem:[#allocation8] sm:$0xf]
    %v227 = vld [vmem:[#allocation8 + $0x4] sm:$0xf]
    %v228 = vld [vmem:[#allocation8 + $0x8] sm:$0xf]
    %v229 = vld [vmem:[#allocation8 + $0xc] sm:$0xf]
    %v234 = vunpack.c.l.b16 %v226
    %v235 = vunpack.c.l.b16 %v227
    %v236 = vunpack.c.l.b16 %v228
    %v237 = vunpack.c.l.b16 %v229
    %v238 = vpack.c.b16 %v235, %v234
    %v239 = vpack.c.b16 %v237, %v236
    %vm242 = vcmask 261120
    %v244 = vsel %vm242, 0, 0
    %246 = vmatpush.bf16.msra.mxu0 0
    %247 = vmatpush.bf16.msra.mxu0 0
    %248 = vmatpush.bf16.msra.mxu0 0
    %249 = vmatpush.bf16.msra.mxu0 0
    %250 = vmatpush.bf16.msra.mxu0 0
    %251 = vmatpush.bf16.msra.mxu0 0
    %252 = vmatpush.bf16.msra.mxu0 %v239
    %253 = vmatpush.bf16.msra.mxu0 %v238
    %254 = vmatmul.bf16.gmra.mxu0 %v244
    %v255 = vpop.f32.mrf.mxu0
    %v256 = vadd.f32 0.0, %v255
    %v257 = vpop.f32.mrf.mxu0
    %258 = vdwg.mxu0
    %v259 = vadd.f32 %v225, %v256
    %v260 = vxor.u32 %v259, 2147483648
    %v261 = vmul.f32 %v260, 1.442695
    %v262 = vpow.pop %v261
    %v263 = vadd.f32 %v262, 1.0
    %v264 = vrcp.pop %v263
    %v265 = vmul.f32 %v263, %v264
    %v266 = vsub.f32 1.0, %v265
    %v267 = vmul.f32 %v264, %v266
    %v268 = vadd.f32 %v264, %v267
    %vm269 = vweird.f32 %v263
    %vm270 = vweird.f32 %v264
    %vm271 = vmor %vm269, %vm270
    %v272 = vsel %vm271, %v264, %v268
    %v273 = vand.u32 2147483647, %v263
    %vm274 = vcmp.eq.f32.partialorder %v273, 8.507059e+37
    %v275 = vand.u32 %v263, 2147483648
    %v276 = vor.u32 1.1754944e-38, %v275
    %v277 = vsel %vm274, %v276, %v272
    %v278 = vmul.f32 1.0, %v277
    %v279 = vtanh.pop %v259
    %v280 = vmul.f32 %v278, 0.0
    %282 = vrot.lane.b32.xlu0 %v279, 64
    %v283 = vpop.permute.xlu0 %282
    %v285 = vmul.f32 %v278, %v283
    %287 = vrot.lane.b32.xlu0 %v285, 32
    %v288 = vpop.permute.xlu0 %287
    %v290 = vadd.f32 %v280, %v288
    %v291 = vtanh.pop %v290
    %293 = vrot.lane.b32.xlu0 %v291, 64
    %v294 = vpop.permute.xlu0 %293
    %v296 = vmul.f32 %v278, %v294
    %s297 = scalar_lea.vmem [#allocation2], 8
    %v298 = vld [vmem:[%s297] sm:$0xff]
    %v299 = vpack.c.bf16 %v296, %v296
    %301 = vrot.lane.b32.xlu0 %v299, 32
    %v302 = vpop.permute.xlu0 %301
    %v304 = vsel %vm242, %v302, 0
    %306 = vmatpush.bf16.msra.mxu0 0
    %307 = vmatpush.bf16.msra.mxu0 0
    %308 = vmatpush.bf16.msra.mxu0 0
    %309 = vmatpush.bf16.msra.mxu0 0
    %310 = vmatpush.bf16.msra.mxu0 0
    %311 = vmatpush.bf16.msra.mxu0 0
    %312 = vmatpush.bf16.msra.mxu0 %v239
    %313 = vmatpush.bf16.msra.mxu0 %v238
    %314 = vmatmul.bf16.gmra.mxu0 %v304
    %v315 = vpop.f32.mrf.mxu0
    %v316 = vadd.f32 0.0, %v315
    %v317 = vpop.f32.mrf.mxu0
    %318 = vdwg.mxu0
    %v319 = vadd.f32 %v298, %v316
    %v320 = vxor.u32 %v319, 2147483648
    %v321 = vmul.f32 %v320, 1.442695
    %v322 = vpow.pop %v321
    %v323 = vadd.f32 %v322, 1.0
    %v324 = vrcp.pop %v323
    %v325 = vmul.f32 %v323, %v324
    %v326 = vsub.f32 1.0, %v325
    %v327 = vmul.f32 %v324, %v326
    %v328 = vadd.f32 %v324, %v327
    %vm329 = vweird.f32 %v323
    %vm330 = vweird.f32 %v324
    %vm331 = vmor %vm329, %vm330
    %v332 = vsel %vm331, %v324, %v328
    %v333 = vand.u32 2147483647, %v323
    %vm334 = vcmp.eq.f32.partialorder %v333, 8.507059e+37
    %v335 = vand.u32 %v323, 2147483648
    %v336 = vor.u32 1.1754944e-38, %v335
    %v337 = vsel %vm334, %v336, %v332
    %v338 = vmul.f32 1.0, %v337
    %v339 = vtanh.pop %v319
    %v340 = vmul.f32 %v338, %v290
    %342 = vrot.lane.b32.xlu0 %v339, 64
    %v343 = vpop.permute.xlu0 %342
    %v345 = vmul.f32 %v338, %v343
    %347 = vrot.lane.b32.xlu0 %v345, 32
    %v348 = vpop.permute.xlu0 %347
    %v350 = vadd.f32 %v340, %v348
    %v351 = vtanh.pop %v350
    %353 = vrot.lane.b32.xlu0 %v351, 64
    %v354 = vpop.permute.xlu0 %353
    %v356 = vmul.f32 %v338, %v354
    %s357 = scalar_lea.vmem [#allocation2], 16
    %v358 = vld [vmem:[%s357] sm:$0xff]
    %v359 = vpack.c.bf16 %v356, %v356
    %361 = vrot.lane.b32.xlu0 %v359, 32
    %v362 = vpop.permute.xlu0 %361
    %v364 = vsel %vm242, %v362, 0
    %366 = vmatpush.bf16.msra.mxu0 0
    %367 = vmatpush.bf16.msra.mxu0 0
    %368 = vmatpush.bf16.msra.mxu0 0
    %369 = vmatpush.bf16.msra.mxu0 0
    %370 = vmatpush.bf16.msra.mxu0 0
    %371 = vmatpush.bf16.msra.mxu0 0
    %372 = vmatpush.bf16.msra.mxu0 %v239
    %373 = vmatpush.bf16.msra.mxu0 %v238
    %374 = vmatmul.bf16.gmra.mxu0 %v364
    %v375 = vpop.f32.mrf.mxu0
    %v376 = vadd.f32 0.0, %v375
    %v377 = vpop.f32.mrf.mxu0
    %378 = vdwg.mxu0
    %v379 = vadd.f32 %v358, %v376
    %v380 = vxor.u32 %v379, 2147483648
    %v381 = vmul.f32 %v380, 1.442695
    %v382 = vpow.pop %v381
    %v383 = vadd.f32 %v382, 1.0
    %v384 = vrcp.pop %v383
    %v385 = vmul.f32 %v383, %v384
    %v386 = vsub.f32 1.0, %v385
    %v387 = vmul.f32 %v384, %v386
    %v388 = vadd.f32 %v384, %v387
    %vm389 = vweird.f32 %v383
    %vm390 = vweird.f32 %v384
    %vm391 = vmor %vm389, %vm390
    %v392 = vsel %vm391, %v384, %v388
    %v393 = vand.u32 2147483647, %v383
    %vm394 = vcmp.eq.f32.partialorder %v393, 8.507059e+37
    %v395 = vand.u32 %v383, 2147483648
    %v396 = vor.u32 1.1754944e-38, %v395
    %v397 = vsel %vm394, %v396, %v392
    %v398 = vmul.f32 1.0, %v397
    %v399 = vtanh.pop %v379
    %v400 = vmul.f32 %v398, %v350
    %402 = vrot.lane.b32.xlu0 %v399, 64
    %v403 = vpop.permute.xlu0 %402
    %v405 = vmul.f32 %v398, %v403
    %407 = vrot.lane.b32.xlu0 %v405, 32
    %v408 = vpop.permute.xlu0 %407
    %v410 = vadd.f32 %v400, %v408
    %v411 = vtanh.pop %v410
    %413 = vrot.lane.b32.xlu0 %v411, 64
    %v414 = vpop.permute.xlu0 %413
    %v416 = vmul.f32 %v398, %v414
    %s417 = scalar_lea.vmem [#allocation2], 24
    %v418 = vld [vmem:[%s417] sm:$0xff]
    %v419 = vpack.c.bf16 %v416, %v416
    %421 = vrot.lane.b32.xlu0 %v419, 32
    %v422 = vpop.permute.xlu0 %421
    %v424 = vsel %vm242, %v422, 0
    %426 = vmatpush.bf16.msra.mxu0 0
    %427 = vmatpush.bf16.msra.mxu0 0
    %428 = vmatpush.bf16.msra.mxu0 0
    %429 = vmatpush.bf16.msra.mxu0 0
    %430 = vmatpush.bf16.msra.mxu0 0
    %431 = vmatpush.bf16.msra.mxu0 0
    %432 = vmatpush.bf16.msra.mxu0 %v239
    %433 = vmatpush.bf16.msra.mxu0 %v238
    %434 = vmatmul.bf16.gmra.mxu0 %v424
    %v435 = vpop.f32.mrf.mxu0
    %v436 = vadd.f32 0.0, %v435
    %v437 = vpop.f32.mrf.mxu0
    %438 = vdwg.mxu0
    %v439 = vadd.f32 %v418, %v436
    %v440 = vxor.u32 %v439, 2147483648
    %v441 = vmul.f32 %v440, 1.442695
    %v442 = vpow.pop %v441
    %v443 = vadd.f32 %v442, 1.0
    %v444 = vrcp.pop %v443
    %v445 = vmul.f32 %v443, %v444
    %v446 = vsub.f32 1.0, %v445
    %v447 = vmul.f32 %v444, %v446
    %v448 = vadd.f32 %v444, %v447
    %vm449 = vweird.f32 %v443
    %vm450 = vweird.f32 %v444
    %vm451 = vmor %vm449, %vm450
    %v452 = vsel %vm451, %v444, %v448
    %v453 = vand.u32 2147483647, %v443
    %vm454 = vcmp.eq.f32.partialorder %v453, 8.507059e+37
    %v455 = vand.u32 %v443, 2147483648
    %v456 = vor.u32 1.1754944e-38, %v455
    %v457 = vsel %vm454, %v456, %v452
    %v458 = vmul.f32 1.0, %v457
    %v459 = vtanh.pop %v439
    %v460 = vmul.f32 %v458, %v410
    %462 = vrot.lane.b32.xlu0 %v459, 64
    %v463 = vpop.permute.xlu0 %462
    %v465 = vmul.f32 %v458, %v463
    %467 = vrot.lane.b32.xlu0 %v465, 32
    %v468 = vpop.permute.xlu0 %467
    %v470 = vadd.f32 %v460, %v468
    %v471 = vtanh.pop %v470
    %473 = vrot.lane.b32.xlu0 %v471, 64
    %v474 = vpop.permute.xlu0 %473
    %v476 = vmul.f32 %v458, %v474
    %s477 = scalar_lea.vmem [#allocation2], 32
    %v478 = vld [vmem:[%s477] sm:$0xff]
    %v479 = vpack.c.bf16 %v476, %v476
    %481 = vrot.lane.b32.xlu0 %v479, 32
    %v482 = vpop.permute.xlu0 %481
    %v484 = vsel %vm242, %v482, 0
    %486 = vmatpush.bf16.msra.mxu0 0
    %487 = vmatpush.bf16.msra.mxu0 0
    %488 = vmatpush.bf16.msra.mxu0 0
    %489 = vmatpush.bf16.msra.mxu0 0
    %490 = vmatpush.bf16.msra.mxu0 0
    %491 = vmatpush.bf16.msra.mxu0 0
    %492 = vmatpush.bf16.msra.mxu0 %v239
    %493 = vmatpush.bf16.msra.mxu0 %v238
    %494 = vmatmul.bf16.gmra.mxu0 %v484
    %v495 = vpop.f32.mrf.mxu0
    %v496 = vadd.f32 0.0, %v495
    %v497 = vpop.f32.mrf.mxu0
    %498 = vdwg.mxu0
    %v499 = vadd.f32 %v478, %v496
    %v500 = vxor.u32 %v499, 2147483648
    %v501 = vmul.f32 %v500, 1.442695
    %v502 = vpow.pop %v501
    %v503 = vadd.f32 %v502, 1.0
    %v504 = vrcp.pop %v503
    %v505 = vmul.f32 %v503, %v504
    %v506 = vsub.f32 1.0, %v505
    %v507 = vmul.f32 %v504, %v506
    %v508 = vadd.f32 %v504, %v507
    %vm509 = vweird.f32 %v503
    %vm510 = vweird.f32 %v504
    %vm511 = vmor %vm509, %vm510
    %v512 = vsel %vm511, %v504, %v508
    %v513 = vand.u32 2147483647, %v503
    %vm514 = vcmp.eq.f32.partialorder %v513, 8.507059e+37
    %v515 = vand.u32 %v503, 2147483648
    %v516 = vor.u32 1.1754944e-38, %v515
    %v517 = vsel %vm514, %v516, %v512
    %v518 = vmul.f32 1.0, %v517
    %v519 = vtanh.pop %v499
    %v520 = vmul.f32 %v518, %v470
    %522 = vrot.lane.b32.xlu0 %v519, 64
    %v523 = vpop.permute.xlu0 %522
    %v525 = vmul.f32 %v518, %v523
    %527 = vrot.lane.b32.xlu0 %v525, 32
    %v528 = vpop.permute.xlu0 %527
    %v530 = vadd.f32 %v520, %v528
    %v531 = vtanh.pop %v530
    %533 = vrot.lane.b32.xlu0 %v531, 64
    %v534 = vpop.permute.xlu0 %533
    %v536 = vmul.f32 %v518, %v534
    %s537 = scalar_lea.vmem [#allocation2], 40
    %v538 = vld [vmem:[%s537] sm:$0xff]
    %v539 = vpack.c.bf16 %v536, %v536
    %541 = vrot.lane.b32.xlu0 %v539, 32
    %v542 = vpop.permute.xlu0 %541
    %v544 = vsel %vm242, %v542, 0
    %546 = vmatpush.bf16.msra.mxu0 0
    %547 = vmatpush.bf16.msra.mxu0 0
    %548 = vmatpush.bf16.msra.mxu0 0
    %549 = vmatpush.bf16.msra.mxu0 0
    %550 = vmatpush.bf16.msra.mxu0 0
    %551 = vmatpush.bf16.msra.mxu0 0
    %552 = vmatpush.bf16.msra.mxu0 %v239
    %553 = vmatpush.bf16.msra.mxu0 %v238
    %554 = vmatmul.bf16.gmra.mxu0 %v544
    %v555 = vpop.f32.mrf.mxu0
    %v556 = vadd.f32 0.0, %v555
    %v557 = vpop.f32.mrf.mxu0
    %558 = vdwg.mxu0
    %v559 = vadd.f32 %v538, %v556
    %v560 = vxor.u32 %v559, 2147483648
    %v561 = vmul.f32 %v560, 1.442695
    %v562 = vpow.pop %v561
    %v563 = vadd.f32 %v562, 1.0
    %v564 = vrcp.pop %v563
    %v565 = vmul.f32 %v563, %v564
    %v566 = vsub.f32 1.0, %v565
    %v567 = vmul.f32 %v564, %v566
    %v568 = vadd.f32 %v564, %v567
    %vm569 = vweird.f32 %v563
    %vm570 = vweird.f32 %v564
    %vm571 = vmor %vm569, %vm570
    %v572 = vsel %vm571, %v564, %v568
    %v573 = vand.u32 2147483647, %v563
    %vm574 = vcmp.eq.f32.partialorder %v573, 8.507059e+37
    %v575 = vand.u32 %v563, 2147483648
    %v576 = vor.u32 1.1754944e-38, %v575
    %v577 = vsel %vm574, %v576, %v572
    %v578 = vmul.f32 1.0, %v577
    %v579 = vtanh.pop %v559
    %v580 = vmul.f32 %v578, %v530
    %582 = vrot.lane.b32.xlu0 %v579, 64
    %v583 = vpop.permute.xlu0 %582
    %v585 = vmul.f32 %v578, %v583
    %587 = vrot.lane.b32.xlu0 %v585, 32
    %v588 = vpop.permute.xlu0 %587
    %v590 = vadd.f32 %v580, %v588
    %v591 = vtanh.pop %v590
    %593 = vrot.lane.b32.xlu0 %v591, 64
    %v594 = vpop.permute.xlu0 %593
    %v596 = vmul.f32 %v578, %v594
    %s597 = scalar_lea.vmem [#allocation2], 48
    %v598 = vld [vmem:[%s597] sm:$0xff]
    %v599 = vpack.c.bf16 %v596, %v596
    %601 = vrot.lane.b32.xlu0 %v599, 32
    %v602 = vpop.permute.xlu0 %601
    %v604 = vsel %vm242, %v602, 0
    %606 = vmatpush.bf16.msra.mxu0 0
    %607 = vmatpush.bf16.msra.mxu0 0
    %608 = vmatpush.bf16.msra.mxu0 0
    %609 = vmatpush.bf16.msra.mxu0 0
    %610 = vmatpush.bf16.msra.mxu0 0
    %611 = vmatpush.bf16.msra.mxu0 0
    %612 = vmatpush.bf16.msra.mxu0 %v239
    %613 = vmatpush.bf16.msra.mxu0 %v238
    %614 = vmatmul.bf16.gmra.mxu0 %v604
    %v615 = vpop.f32.mrf.mxu0
    %v616 = vadd.f32 0.0, %v615
    %v617 = vpop.f32.mrf.mxu0
    %618 = vdwg.mxu0
    %v619 = vadd.f32 %v598, %v616
    %v620 = vxor.u32 %v619, 2147483648
    %v621 = vmul.f32 %v620, 1.442695
    %v622 = vpow.pop %v621
    %v623 = vadd.f32 %v622, 1.0
    %v624 = vrcp.pop %v623
    %v625 = vmul.f32 %v623, %v624
    %v626 = vsub.f32 1.0, %v625
    %v627 = vmul.f32 %v624, %v626
    %v628 = vadd.f32 %v624, %v627
    %vm629 = vweird.f32 %v623
    %vm630 = vweird.f32 %v624
    %vm631 = vmor %vm629, %vm630
    %v632 = vsel %vm631, %v624, %v628
    %v633 = vand.u32 2147483647, %v623
    %vm634 = vcmp.eq.f32.partialorder %v633, 8.507059e+37
    %v635 = vand.u32 %v623, 2147483648
    %v636 = vor.u32 1.1754944e-38, %v635
    %v637 = vsel %vm634, %v636, %v632
    %v638 = vmul.f32 1.0, %v637
    %v639 = vtanh.pop %v619
    %v640 = vmul.f32 %v638, %v590
    %642 = vrot.lane.b32.xlu0 %v639, 64
    %v643 = vpop.permute.xlu0 %642
    %v645 = vmul.f32 %v638, %v643
    %647 = vrot.lane.b32.xlu0 %v645, 32
    %v648 = vpop.permute.xlu0 %647
    %v650 = vadd.f32 %v640, %v648
    %v651 = vtanh.pop %v650
    %653 = vrot.lane.b32.xlu0 %v651, 64
    %v654 = vpop.permute.xlu0 %653
    %v656 = vmul.f32 %v638, %v654
    %s657 = scalar_lea.vmem [#allocation2], 56
    %v658 = vld [vmem:[%s657] sm:$0xff]
    %v659 = vpack.c.bf16 %v656, %v656
    %661 = vrot.lane.b32.xlu0 %v659, 32
    %v662 = vpop.permute.xlu0 %661
    %v664 = vsel %vm242, %v662, 0
    %666 = vmatpush.bf16.msra.mxu0 0
    %667 = vmatpush.bf16.msra.mxu0 0
    %668 = vmatpush.bf16.msra.mxu0 0
    %669 = vmatpush.bf16.msra.mxu0 0
    %670 = vmatpush.bf16.msra.mxu0 0
    %671 = vmatpush.bf16.msra.mxu0 0
    %672 = vmatpush.bf16.msra.mxu0 %v239
    %673 = vmatpush.bf16.msra.mxu0 %v238
    %674 = vmatmul.bf16.gmra.mxu0 %v664
    %v675 = vpop.f32.mrf.mxu0
    %v676 = vadd.f32 0.0, %v675
    %v677 = vpop.f32.mrf.mxu0
    %678 = vdwg.mxu0
    %v679 = vadd.f32 %v658, %v676
    %v680 = vxor.u32 %v679, 2147483648
    %v681 = vmul.f32 %v680, 1.442695
    %v682 = vpow.pop %v681
    %v683 = vadd.f32 %v682, 1.0
    %v684 = vrcp.pop %v683
    %v685 = vmul.f32 %v683, %v684
    %v686 = vsub.f32 1.0, %v685
    %v687 = vmul.f32 %v684, %v686
    %v688 = vadd.f32 %v684, %v687
    %vm689 = vweird.f32 %v683
    %vm690 = vweird.f32 %v684
    %vm691 = vmor %vm689, %vm690
    %v692 = vsel %vm691, %v684, %v688
    %v693 = vand.u32 2147483647, %v683
    %vm694 = vcmp.eq.f32.partialorder %v693, 8.507059e+37
    %v695 = vand.u32 %v683, 2147483648
    %v696 = vor.u32 1.1754944e-38, %v695
    %v697 = vsel %vm694, %v696, %v692
    %v698 = vmul.f32 1.0, %v697
    %v699 = vtanh.pop %v679
    %v700 = vmul.f32 %v698, %v650
    %702 = vrot.lane.b32.xlu0 %v699, 64
    %v703 = vpop.permute.xlu0 %702
    %v705 = vmul.f32 %v698, %v703
    %707 = vrot.lane.b32.xlu0 %v705, 32
    %v708 = vpop.permute.xlu0 %707
    %v710 = vadd.f32 %v700, %v708
    %v711 = vtanh.pop %v710
    %713 = vrot.lane.b32.xlu0 %v711, 64
    %v714 = vpop.permute.xlu0 %713
    %v716 = vmul.f32 %v698, %v714
    %v717 = vpack.c.bf16 %v716, %v716
    %v718 = vld [vmem:[#allocation9] sm:$0xf]
    %v719 = vld [vmem:[#allocation9 + $0x4] sm:$0xf]
    %v720 = vld [vmem:[#allocation9 + $0x8] sm:$0xf]
    %v721 = vld [vmem:[#allocation9 + $0xc] sm:$0xf]
    %v722 = vld [vmem:[%s5] sm:$0x1]
    %v724 = vperm.slane %v722, 0
    %727 = vrot.lane.b32.xlu0 %v717, 32
    %v728 = vpop.permute.xlu0 %727
    %v733 = vunpack.c.l.b16 %v718
    %v734 = vunpack.c.l.b16 %v719
    %v735 = vunpack.c.l.b16 %v720
    %v736 = vunpack.c.l.b16 %v721
    %v737 = vpack.c.b16 %v734, %v733
    %v738 = vpack.c.b16 %v736, %v735
    %v742 = vsel %vm242, %v728, 0
    %744 = vmatpush.bf16.msra.mxu0 0
    %745 = vmatpush.bf16.msra.mxu0 0
    %746 = vmatpush.bf16.msra.mxu0 0
    %747 = vmatpush.bf16.msra.mxu0 0
    %748 = vmatpush.bf16.msra.mxu0 0
    %749 = vmatpush.bf16.msra.mxu0 0
    %750 = vmatpush.bf16.msra.mxu0 %v738
    %751 = vmatpush.bf16.msra.mxu0 %v737
    %752 = vmatmul.bf16.gmra.mxu0 %v742
    %v753 = vpop.f32.mrf.mxu0
    %v754 = vadd.f32 %v724, %v753
    %v755 = vpop.f32.mrf.mxu0
    %756 = vdwg.mxu0
    %v757 = vxor.u32 %v754, 2147483648
    %v758 = vmul.f32 %v757, 1.442695
    %v759 = vpow.pop %v758
    %v760 = vadd.f32 %v759, 1.0
    %v761 = vrcp.pop %v760
    %v762 = vmul.f32 %v760, %v761
    %v763 = vsub.f32 1.0, %v762
    %v764 = vmul.f32 %v761, %v763
    %v765 = vadd.f32 %v761, %v764
    %vm766 = vweird.f32 %v760
    %vm767 = vweird.f32 %v761
    %vm768 = vmor %vm766, %vm767
    %v769 = vsel %vm768, %v761, %v765
    %v770 = vand.u32 2147483647, %v760
    %vm771 = vcmp.eq.f32.partialorder %v770, 8.507059e+37
    %v772 = vand.u32 %v760, 2147483648
    %v773 = vor.u32 1.1754944e-38, %v772
    %v774 = vsel %vm771, %v773, %v769
    %v775 = vmul.f32 1.0, %v774
    %776 = vst [vmem:[#allocation11] sm:$0xff] %v775
    // Predicated region
    $region42: #{tpu_custom_call.1} parent=1 // pred_check
      _
    $region43: #{tpu_custom_call.1} parent=1 // pred_check_branch
      %778 = sbr.rel (0) target = $region45
    $region44: #{tpu_custom_call.1} parent=1 // pred_region
      %780 = vsyncadd [#allocation5], 0
      %s782 = sshll.u32 [#allocation11], 4
      %s783 = int_to_ptr.vmem [resolvable:$true] %s782
      %s784 = sshll.u32 %s6, 4
      %s785 = int_to_ptr.hbm [resolvable:$true] %s784
      %787 = dma.vmem_to_hbm [thread:$0]  %s783, 128, %s785, [#allocation5]
    $region45: #{tpu_custom_call.1} parent=1 // pred_fallthru
      _
    // Predicated region
    $region46: #{tpu_custom_call.1} parent=1 // pred_check
      _
    $region47: #{tpu_custom_call.1} parent=1 // pred_check_branch
      %789 = sbr.rel (0) target = $region49
    $region48: #{tpu_custom_call.1} parent=1 // pred_region
      %791 = dma.done [#allocation5], 128
    $region49: #{tpu_custom_call.1} parent=1 // pred_fallthru
      _
    %792 = vsyncpa [#allocation4], 1
    %793 = vsyncpa [#allocation7], 1
    %794 = vsyncpa [#allocation10], 1
    %795 = vsyncpa [#allocation5], 1

</llo_original>
